<compile_context>
chip_gen: v6e
topology: v6e:2x2x1
jax: 0.10.0
libtpu: 0.0.40
codegen_flags: <defaults>
</compile_context>

<pallas_src>
import functools

import jax
import jax.numpy as jnp
from jax import lax
from jax.experimental import pallas as pl
from jax.experimental.pallas import tpu as pltpu


def _round_up(x, m):
    return (x + m - 1) // m * m


def attention_kernel(hid_ref, enc_ref, nrel_ref,
                     w1e_ref, w1h_ref, b1_ref, w2_ref,
                     ctx_ref, alpha_ref, *,
                     compute_dtype, tanh_dtype, approx_recip):
    TB, S, D = enc_ref.shape
    f32 = jnp.float32

    enc = enc_ref[...]                                   # (TB, S, D) input dtype
    hid = hid_ref[...]                                   # (TB, D)

    # linear1 on concat(enc, hid), split into two matmuls.  The enc matmul runs
    # on the 2-D flattening (layout-free when S is a sublane multiple of the
    # input dtype); operands are cast to the compute dtype in-kernel so no
    # padded/cast copy of enc ever touches HBM; accumulation is f32.
    enc2d = enc.reshape(TB * S, D).astype(compute_dtype)
    h2d = jnp.dot(enc2d, w1e_ref[...], preferred_element_type=f32)       # (TB*S, D)

    # hid @ W1h with b1 folded once per tile: a (TB, D) add, not a (TB, S, D) add.
    hid_bias = jnp.dot(hid.astype(compute_dtype), w1h_ref[...],
                       preferred_element_type=f32) + b1_ref[...]         # (TB, D)

    h = h2d.reshape(TB, S, D) + hid_bias[:, None, :]
    # tanh on the EUP; bf16 tanh ~doubles EUP throughput on v6e/v7x.
    h = jnp.tanh(h.astype(tanh_dtype)).astype(f32)

    # linear2 (out_features = 1): VPU multiply + lane reduce.
    e = jnp.sum(h * w2_ref[...], axis=-1)                                # (TB, S)

    # mask s >= n_rel[b]; finite large-negative so n_rel == 0 rows don't NaN.
    nrel = nrel_ref[...]                                                 # (TB, 1)
    idx = lax.broadcasted_iota(jnp.int32, (TB, S), 1)
    e = jnp.where(idx < nrel, e, -1e30)

    # softmax over the sequence axis (kept in f32; only TB*S exps).
    m = jnp.max(e, axis=1, keepdims=True)
    p = jnp.exp(e - m)
    denom = jnp.sum(p, axis=1, keepdims=True)
    alpha = p * pl.reciprocal(denom, approx=approx_recip)                # (TB, S)

    # context[b,:] = sum_s alpha[b,s] * enc[b,s,:] as a VPU broadcast-multiply
    # + sublane reduce over S (avoids TB serialized M=1 MXU matmuls and keeps
    # the weighted sum at f32 precision).
    ctx = jnp.sum(alpha[:, :, None] * enc.astype(f32), axis=1)           # (TB, D)

    ctx_ref[...] = ctx.astype(ctx_ref.dtype)
    alpha_ref[...] = alpha.astype(alpha_ref.dtype)


def attention_forward(hidden_state, encoder_outputs, n_rel, W1, b1, W2, *,
                      compute_dtype=jnp.bfloat16, tanh_dtype=None,
                      block_b=None, vmem_limit_bytes=None):
    """hidden_state (B,D), encoder_outputs (B,S,D), n_rel (B,) int,
       W1 (D, 2D), b1 (D,), W2 (1, D).  Returns (context (B,D), alpha (B,S)).

    compute_dtype: MXU-operand / tanh dtype.  Use jnp.float32 on v5e (no bf16
    VPU/EUP) or when tight numerical agreement with the reference is needed."""
    B, S, D = encoder_outputs.shape
    f32 = jnp.float32
    in_dtype = encoder_outputs.dtype
    in_itemsize = jnp.dtype(in_dtype).itemsize
    c_itemsize = jnp.dtype(compute_dtype).itemsize
    if tanh_dtype is None:
        tanh_dtype = compute_dtype
    approx_recip = jnp.dtype(compute_dtype) != jnp.dtype(jnp.float32)

    # ---- batch tile size ---------------------------------------------------
    # Per-batch-row VMEM footprint: enc tile (double-buffered, input dtype)
    # plus the in-kernel compute-dtype / f32 intermediates.
    per_row_bytes = S * D * (2 * in_itemsize + c_itemsize + 16) + S * 24 + D * 16
    try:
        vmem_cap = pltpu.get_tpu_info().vmem_capacity_bytes
    except Exception:                      # interpret mode / older runtimes
        vmem_cap = 64 * 1024 * 1024        # v7x class = smallest VMEM generation
    if block_b is None:
        block_b = (vmem_cap // 4) // max(per_row_bytes, 1)
    tb_max = max(8, min(512, (block_b // 8) * 8))
    if B > 8:
        # guarantee >= 2 grid steps so the "parallel" axis can split across the
        # two v7x TensorCores (harmless on v5e/v6e).
        tb_max = min(tb_max, _round_up(pl.cdiv(B, 2), 8))
    # Near-balanced tiles: batch padding stays below one sublane group per tile
    # (fixes the old up-to-2x over-padding of the batch axis).
    num_tiles = pl.cdiv(B, tb_max)
    TB = _round_up(pl.cdiv(B, num_tiles), 8)
    grid_b = pl.cdiv(B, TB)
    B_pad = grid_b * TB

    # ---- host-side glue (no pad/cast pass over the big activations) ---------
    pad_b = B_pad - B
    enc_p = jnp.pad(encoder_outputs, ((0, pad_b), (0, 0), (0, 0)))
    hid_p = jnp.pad(hidden_state, ((0, pad_b), (0, 0)))
    nrel_p = jnp.pad(n_rel.astype(jnp.int32), (0, pad_b)).reshape(B_pad, 1)

    # Tiny resident weights: split + pre-transpose linear1, pre-cast MXU
    # operands; bias / score vector stay f32.
    w1e = jnp.asarray(W1[:, :D].T, dtype=compute_dtype)          # (D, D)
    w1h = jnp.asarray(W1[:, D:].T, dtype=compute_dtype)          # (D, D)
    b1_r = jnp.asarray(b1, dtype=f32).reshape(1, D)
    w2_r = jnp.asarray(W2, dtype=f32).reshape(1, D)

    # ---- VMEM limit derived from the actual buffers --------------------------
    io_bytes = 2 * (TB * S * D * in_itemsize + TB * D * in_itemsize + TB * 4
                    + TB * D * 4 + TB * S * 4)                    # double-buffered I/O
    w_bytes = 2 * (2 * D * D * c_itemsize + 2 * D * 4)            # resident weights
    scratch_bytes = TB * S * D * (c_itemsize + 12) + TB * S * 32 + TB * D * 8
    if vmem_limit_bytes is None:
        vmem_limit_bytes = int(min(max(2 * (io_bytes + w_bytes + scratch_bytes),
                                       32 * 1024 * 1024),
                                   64 * 1024 * 1024))

    # ---- cost estimate at TRUE (unpadded) sizes ------------------------------
    flops = int(2 * B * S * D * D        # enc @ W1e
                + 2 * B * D * D          # hid @ W1h
                + 2 * B * S * D          # scores  (h . w2)
                + 2 * B * S * D)         # context (alpha . enc)
    transcendentals = int(B * S * D + B * S)                      # tanh + exp
    bytes_accessed = int(enc_p.size * in_itemsize + hid_p.size * in_itemsize
                         + nrel_p.size * 4
                         + (w1e.size + w1h.size) * c_itemsize
                         + (b1_r.size + w2_r.size) * 4
                         + B_pad * D * 4 + B_pad * S * 4)

    kernel = functools.partial(attention_kernel,
                               compute_dtype=compute_dtype,
                               tanh_dtype=tanh_dtype,
                               approx_recip=approx_recip)

    in_specs = [
        pl.BlockSpec((TB, D), lambda i: (i, 0)),        # hidden_state   (true D)
        pl.BlockSpec((TB, S, D), lambda i: (i, 0, 0)),  # encoder_outputs (true S, D)
        pl.BlockSpec((TB, 1), lambda i: (i, 0)),        # n_rel
        pl.BlockSpec((D, D), lambda i: (0, 0)),         # W1[:, :D].T  (resident)
        pl.BlockSpec((D, D), lambda i: (0, 0)),         # W1[:, D:].T  (resident)
        pl.BlockSpec((1, D), lambda i: (0, 0)),         # b1           (resident)
        pl.BlockSpec((1, D), lambda i: (0, 0)),         # W2           (resident)
    ]
    out_specs = (
        pl.BlockSpec((TB, D), lambda i: (i, 0)),        # context
        pl.BlockSpec((TB, S), lambda i: (i, 0)),        # alpha
    )

    ctx_p, alpha_p = pl.pallas_call(
        kernel,
        out_shape=(jax.ShapeDtypeStruct((B_pad, D), f32),
                   jax.ShapeDtypeStruct((B_pad, S), f32)),
        grid=(grid_b,),
        in_specs=in_specs,
        out_specs=out_specs,
        compiler_params=pltpu.CompilerParams(
            dimension_semantics=("parallel",),
            vmem_limit_bytes=vmem_limit_bytes),
        cost_estimate=pl.CostEstimate(flops=flops,
                                      transcendentals=transcendentals,
                                      bytes_accessed=bytes_accessed),
    )(hid_p, enc_p, nrel_p, w1e, w1h, b1_r, w2_r)

    return ctx_p[:B], alpha_p[:B]


def reference_forward(hidden_state, encoder_outputs, n_rel, W1, b1, W2):
    B, S, D = encoder_outputs.shape
    hid_rep = jnp.repeat(hidden_state[:, None, :], S, axis=1)
    inputs = jnp.concatenate([encoder_outputs, hid_rep], axis=2).reshape(-1, 2 * D)
    o = jnp.tanh(inputs @ W1.T + b1) @ W2.T
    e = o.reshape(B, S)
    idx = jnp.arange(S)[None, :]
    e = jnp.where(idx < n_rel[:, None], e, -jnp.inf)
    alpha = jax.nn.softmax(e, axis=1)
    context = jnp.einsum('bs,bsd->bd', alpha, encoder_outputs)
    return context, alpha


if __name__ == "__main__":
    B, S, D = 2, 8, 32

    key = jax.random.PRNGKey(0)
    k1, k2, k3, k4, k5 = jax.random.split(key, 5)

    # deterministic synthetic parameters (kaiming-normal-like std; uniform bias)
    W1 = jax.random.normal(k1, (D, 2 * D), jnp.float32) * jnp.sqrt(2.0 / (2 * D))
    b1 = (jax.random.uniform(k2, (D,), jnp.float32) * 2.0 - 1.0) / jnp.sqrt(2.0 * D)
    W2 = jax.random.normal(k3, (1, D), jnp.float32) * jnp.sqrt(2.0 / D)

    hidden_state = jax.random.normal(k4, (B, D), jnp.float32)
    encoder_outputs = jax.random.normal(k5, (B, S, D), jnp.float32)
    n_rel = jnp.array([5, 8], dtype=jnp.int32)

    ctx_ref, alpha_ref = reference_forward(hidden_state, encoder_outputs, n_rel, W1, b1, W2)

    # 1) f32 compute path: verifies kernel semantics at tight tolerance.
    ctx32, a32 = attention_forward(hidden_state, encoder_outputs, n_rel, W1, b1, W2,
                                   compute_dtype=jnp.float32)
    jax.block_until_ready((ctx32, a32))
    assert jnp.allclose(ctx32, ctx_ref, atol=1e-4, rtol=1e-4)
    assert jnp.allclose(a32, alpha_ref, atol=1e-4, rtol=1e-4)

    # 2) default bf16 MXU/EUP path: performance configuration, loose tolerance
    #    (bf16 matmuls + bf16 tanh + approx reciprocal).
    ctxbf, abf = attention_forward(hidden_state, encoder_outputs, n_rel, W1, b1, W2)
    jax.block_until_ready((ctxbf, abf))
    assert jnp.allclose(ctxbf, ctx_ref, atol=1e-1, rtol=1e-1)
    assert jnp.allclose(abf, alpha_ref, atol=1e-1, rtol=1e-1)

    print("KERNEL_OK")
</pallas_src>

<mosaic_0001>
module attributes {stable_mosaic.version = 11 : i64} {
  func.func @attention_kernel(%arg0: i32, %arg1: memref<8x32xf32, #tpu.memory_space<vmem>>, %arg2: memref<8x8x32xf32, #tpu.memory_space<vmem>>, %arg3: memref<8x1xi32, #tpu.memory_space<vmem>>, %arg4: memref<32x32xf32, #tpu.memory_space<vmem>>, %arg5: memref<32x32xf32, #tpu.memory_space<vmem>>, %arg6: memref<1x32xf32, #tpu.memory_space<vmem>>, %arg7: memref<1x32xf32, #tpu.memory_space<vmem>>, %arg8: memref<8x32xf32, #tpu.memory_space<vmem>>, %arg9: memref<8x8xf32, #tpu.memory_space<vmem>>) attributes {dimension_semantics = [#tpu.dimension_semantics<parallel>], iteration_bounds = array<i64: 1>, scalar_prefetch = 0 : i64, scratch_operands = 0 : i64, tpu.core_type = #tpu.core_type<tc>, window_params = [{transform_indices = @transform_0, window_bounds = array<i64: 8, 32>}, {transform_indices = @transform_1, window_bounds = array<i64: 8, 8, 32>}, {transform_indices = @transform_2, window_bounds = array<i64: 8, 1>}, {pipeline_mode = #tpu.pipeline_mode<synchronous>, transform_indices = @transform_3, window_bounds = array<i64: 32, 32>}, {pipeline_mode = #tpu.pipeline_mode<synchronous>, transform_indices = @transform_4, window_bounds = array<i64: 32, 32>}, {pipeline_mode = #tpu.pipeline_mode<synchronous>, transform_indices = @transform_5, window_bounds = array<i64: 1, 32>}, {pipeline_mode = #tpu.pipeline_mode<synchronous>, transform_indices = @transform_6, window_bounds = array<i64: 1, 32>}, {transform_indices = @transform_7, window_bounds = array<i64: 8, 32>}, {transform_indices = @transform_8, window_bounds = array<i64: 8, 8>}]} {
    %c0 = arith.constant 0 : index
    %c0_0 = arith.constant 0 : index
    %c0_1 = arith.constant 0 : index
    %0 = vector.load %arg2[%c0, %c0_0, %c0_1] : memref<8x8x32xf32, #tpu.memory_space<vmem>>, vector<8x8x32xf32>
    %c0_2 = arith.constant 0 : index
    %c0_3 = arith.constant 0 : index
    %1 = vector.load %arg1[%c0_2, %c0_3] : memref<8x32xf32, #tpu.memory_space<vmem>>, vector<8x32xf32>
    %2 = vector.shape_cast %0 : vector<8x8x32xf32> to vector<64x32xf32>
    %c0_4 = arith.constant 0 : index
    %c0_5 = arith.constant 0 : index
    %3 = vector.load %arg4[%c0_4, %c0_5] : memref<32x32xf32, #tpu.memory_space<vmem>>, vector<32x32xf32>
    %cst = arith.constant dense<0.000000e+00> : vector<64x32xf32>
    %4 = tpu.matmul %2, %3, %cst {dimension_numbers = #tpu.dot_dimension_numbers<[1], [0], [0], [1], [0, 0, 1, 1], [], []>} : vector<64x32xf32>, vector<32x32xf32>, vector<64x32xf32> -> vector<64x32xf32>
    %c0_6 = arith.constant 0 : index
    %c0_7 = arith.constant 0 : index
    %5 = vector.load %arg5[%c0_6, %c0_7] : memref<32x32xf32, #tpu.memory_space<vmem>>, vector<32x32xf32>
    %cst_8 = arith.constant dense<0.000000e+00> : vector<8x32xf32>
    %6 = tpu.matmul %1, %5, %cst_8 {dimension_numbers = #tpu.dot_dimension_numbers<[1], [0], [0], [1], [0, 0, 1, 1], [], []>} : vector<8x32xf32>, vector<32x32xf32>, vector<8x32xf32> -> vector<8x32xf32>
    %c0_9 = arith.constant 0 : index
    %c0_10 = arith.constant 0 : index
    %7 = vector.load %arg6[%c0_9, %c0_10] : memref<1x32xf32, #tpu.memory_space<vmem>>, vector<1x32xf32>
    %8 = vector.broadcast %7 : vector<1x32xf32> to vector<8x32xf32>
    %9 = arith.addf %6, %8 : vector<8x32xf32>
    %10 = vector.shape_cast %4 : vector<64x32xf32> to vector<8x8x32xf32>
    %11 = vector.shape_cast %9 : vector<8x32xf32> to vector<8x1x32xf32>
    %12 = vector.broadcast %11 : vector<8x1x32xf32> to vector<8x8x32xf32>
    %13 = arith.addf %10, %12 : vector<8x8x32xf32>
    %14 = math.tanh %13 : vector<8x8x32xf32>
    %c0_11 = arith.constant 0 : index
    %c0_12 = arith.constant 0 : index
    %15 = vector.load %arg7[%c0_11, %c0_12] : memref<1x32xf32, #tpu.memory_space<vmem>>, vector<1x32xf32>
    %16 = vector.shape_cast %15 : vector<1x32xf32> to vector<1x1x32xf32>
    %17 = vector.broadcast %16 : vector<1x1x32xf32> to vector<8x8x32xf32>
    %18 = arith.mulf %14, %17 : vector<8x8x32xf32>
    %cst_13 = arith.constant dense<0.000000e+00> : vector<8x8xf32>
    %19 = vector.multi_reduction <add>, %18, %cst_13 [2] : vector<8x8x32xf32> to vector<8x8xf32>
    %c0_14 = arith.constant 0 : index
    %c0_15 = arith.constant 0 : index
    %20 = vector.load %arg3[%c0_14, %c0_15] : memref<8x1xi32, #tpu.memory_space<vmem>>, vector<8x1xi32>
    %21 = tpu.iota {dimensions = array<i32: 1>} : vector<8x8xi32>
    %22 = vector.broadcast %20 : vector<8x1xi32> to vector<8x8xi32>
    %23 = arith.cmpi slt, %21, %22 : vector<8x8xi32>
    %cst_16 = arith.constant -1.000000e+30 : f32
    %24 = vector.broadcast %cst_16 : f32 to vector<8x8xf32>
    %25 = arith.select %23, %19, %24 : vector<8x8xi1>, vector<8x8xf32>
    %cst_17 = arith.constant dense<0xFF800000> : vector<8xf32>
    %26 = vector.multi_reduction <maximumf>, %25, %cst_17 [1] : vector<8x8xf32> to vector<8xf32>
    %27 = vector.shape_cast %26 : vector<8xf32> to vector<8x1xf32>
    %28 = vector.broadcast %27 : vector<8x1xf32> to vector<8x8xf32>
    %29 = arith.subf %25, %28 : vector<8x8xf32>
    %30 = math.exp %29 : vector<8x8xf32>
    %cst_18 = arith.constant dense<0.000000e+00> : vector<8xf32>
    %31 = vector.multi_reduction <add>, %30, %cst_18 [1] : vector<8x8xf32> to vector<8xf32>
    %32 = vector.shape_cast %31 : vector<8xf32> to vector<8x1xf32>
    %33 = tpu.reciprocal %32 : vector<8x1xf32> -> vector<8x1xf32>
    %34 = vector.broadcast %33 : vector<8x1xf32> to vector<8x8xf32>
    %35 = arith.mulf %30, %34 : vector<8x8xf32>
    %36 = vector.shape_cast %35 : vector<8x8xf32> to vector<8x8x1xf32>
    %37 = vector.broadcast %36 : vector<8x8x1xf32> to vector<8x8x32xf32>
    %38 = arith.mulf %37, %0 : vector<8x8x32xf32>
    %cst_19 = arith.constant dense<0.000000e+00> : vector<8x32xf32>
    %39 = vector.multi_reduction <add>, %38, %cst_19 [1] : vector<8x8x32xf32> to vector<8x32xf32>
    %c0_20 = arith.constant 0 : index
    %c0_21 = arith.constant 0 : index
    %40 = vector.load %arg8[%c0_20, %c0_21] : memref<8x32xf32, #tpu.memory_space<vmem>>, vector<8x32xf32>
    tpu.vector_store %arg8[%c0_20, %c0_21], %39 {strides = array<i32>} : memref<8x32xf32, #tpu.memory_space<vmem>>, vector<8x32xf32>,
    %c0_22 = arith.constant 0 : index
    %c0_23 = arith.constant 0 : index
    %41 = vector.load %arg9[%c0_22, %c0_23] : memref<8x8xf32, #tpu.memory_space<vmem>>, vector<8x8xf32>
    tpu.vector_store %arg9[%c0_22, %c0_23], %35 {strides = array<i32>} : memref<8x8xf32, #tpu.memory_space<vmem>>, vector<8x8xf32>,
    return
  }
  func.func @transform_0(%arg0: i32) -> (i32, i32) {
    %c0_i32 = arith.constant 0 : i32
    %c0_i32_0 = arith.constant 0 : i32
    return %arg0, %c0_i32 : i32, i32
  }
  func.func @transform_1(%arg0: i32) -> (i32, i32, i32) {
    %c0_i32 = arith.constant 0 : i32
    %c0_i32_0 = arith.constant 0 : i32
    %c0_i32_1 = arith.constant 0 : i32
    return %arg0, %c0_i32, %c0_i32_0 : i32, i32, i32
  }
  func.func @transform_2(%arg0: i32) -> (i32, i32) {
    %c0_i32 = arith.constant 0 : i32
    %c0_i32_0 = arith.constant 0 : i32
    return %arg0, %c0_i32 : i32, i32
  }
  func.func @transform_3(%arg0: i32) -> (i32, i32) {
    %c0_i32 = arith.constant 0 : i32
    %c0_i32_0 = arith.constant 0 : i32
    %c0_i32_1 = arith.constant 0 : i32
    return %c0_i32, %c0_i32_0 : i32, i32
  }
  func.func @transform_4(%arg0: i32) -> (i32, i32) {
    %c0_i32 = arith.constant 0 : i32
    %c0_i32_0 = arith.constant 0 : i32
    %c0_i32_1 = arith.constant 0 : i32
    return %c0_i32, %c0_i32_0 : i32, i32
  }
  func.func @transform_5(%arg0: i32) -> (i32, i32) {
    %c0_i32 = arith.constant 0 : i32
    %c0_i32_0 = arith.constant 0 : i32
    %c0_i32_1 = arith.constant 0 : i32
    return %c0_i32, %c0_i32_0 : i32, i32
  }
  func.func @transform_6(%arg0: i32) -> (i32, i32) {
    %c0_i32 = arith.constant 0 : i32
    %c0_i32_0 = arith.constant 0 : i32
    %c0_i32_1 = arith.constant 0 : i32
    return %c0_i32, %c0_i32_0 : i32, i32
  }
  func.func @transform_7(%arg0: i32) -> (i32, i32) {
    %c0_i32 = arith.constant 0 : i32
    %c0_i32_0 = arith.constant 0 : i32
    return %arg0, %c0_i32 : i32, i32
  }
  func.func @transform_8(%arg0: i32) -> (i32, i32) {
    %c0_i32 = arith.constant 0 : i32
    %c0_i32_0 = arith.constant 0 : i32
    return %arg0, %c0_i32 : i32, i32
  }
}

</mosaic_0001>

<llo_original>
// kernel: tpu_custom_call.1
$region0: #{tpu_custom_call.1}
  #allocation0 [shape = 'u32[]', space=smem, size = 0x4, offset = 0x4, fixed_abs, tag = 'smem constant byte address 0x4 - core index']
  #allocation1 [shape = 'u32[144,128]{1,0:T(1,128)}', space=vmem, size = 0x12000, scoped, tag = 'internal scratch']
  %s0 = inlined_call_operand.vmem [shape: f32[8,32], index: 0, kind: input, shape index: {}]
  %s1 = inlined_call_operand.hbm [shape: f32[8,8,32], index: 1, kind: input, shape index: {}]
  %s2 = inlined_call_operand.vmem [shape: s32[8,1], index: 2, kind: input, shape index: {}]
  %s3 = inlined_call_operand.hbm [shape: f32[32,32], index: 3, kind: input, shape index: {}]
  %s4 = inlined_call_operand.hbm [shape: f32[32,32], index: 4, kind: input, shape index: {}]
  %s5 = inlined_call_operand.vmem [shape: f32[1,32], index: 5, kind: input, shape index: {}]
  %s6 = inlined_call_operand.vmem [shape: f32[1,32], index: 6, kind: input, shape index: {}]
  %s7 = inlined_call_operand.hbm [shape: f32[8,32], index: 7, kind: output, shape index: {0}]
  %s8 = inlined_call_operand.hbm [shape: f32[8,8], index: 8, kind: output, shape index: {1}]
  %9 = xla_tuple %s7, %s8
  %s10 = sld [smem:[#allocation0]]
  $region58: #{tpu_custom_call.1} parent=0
    _
  %s12 = ssub.s32 1, %s10
  %s13 = scalar_select 0, %s12, %s10
  $region1: #{tpu_custom_call.1} parent=0
    #allocation2 [shape = 'u8[32768]{0}', space=vmem, size = 0x8000, scoped, tag = 'input window, operand 1, single buffered']
    #allocation3 [shape = 's32[1]{0}', space=sflag, size = 0x4, scoped, tag = 'scoped memory for tpu_custom_call.1']
    #allocation4 [shape = 's32[1]{0}', space=sflag, size = 0x4, scoped, tag = 'scoped memory for tpu_custom_call.1']
    #allocation5 [shape = 'u8[16384]{0}', space=vmem, size = 0x4000, scoped, tag = 'input window, operand 3, single buffered']
    #allocation6 [shape = 's32[1]{0}', space=sflag, size = 0x4, scoped, tag = 'scoped memory for tpu_custom_call.1']
    #allocation7 [shape = 'u8[16384]{0}', space=vmem, size = 0x4000, scoped, tag = 'input window, operand 4, single buffered']
    #allocation8 [shape = 'u8[4096]{0}', space=vmem, size = 0x1000, scoped, tag = 'output window, operand 0, single buffered']
    #allocation9 [shape = 'u8[4096]{0}', space=vmem, size = 0x1000, scoped, tag = 'output window, operand 1, single buffered']
    #allocation10 [shape = 's32[1]{0}', space=sflag, size = 0x4, scoped, tag = 'scoped memory for tpu_custom_call.1']
    %14 = vsyncpa [#allocation3], 0
    %15 = vsyncpa [#allocation6], 0
    %16 = vsyncpa [#allocation4], 0
    %17 = vsyncpa [#allocation10], 0
    // Predicated region
    $region2: #{tpu_custom_call.1} parent=1 // pred_check
      _
    $region3: #{tpu_custom_call.1} parent=1 // pred_check_branch
      %19 = sbr.rel (0) target = $region5
    $region4: #{tpu_custom_call.1} parent=1 // pred_region
      _
    $region5: #{tpu_custom_call.1} parent=1 // pred_fallthru
      _
    // Predicated region
    $region6: #{tpu_custom_call.1} parent=1 // pred_check
      _
    $region7: #{tpu_custom_call.1} parent=1 // pred_check_branch
      %21 = sbr.rel (0) target = $region9
    $region8: #{tpu_custom_call.1} parent=1 // pred_region
      %s23 = ssub.s32 1024, 1024
      %24 = vsyncadd [#allocation3], %s23
      %s25 = sshll.u32 [#allocation2], 4
      %s26 = int_to_ptr.vmem [resolvable:$true] %s25
      %31 = dma.hbm_to_vmem [thread:$0]  %s1, 1024, %s26, [#allocation3], 128, 128, 8
    $region9: #{tpu_custom_call.1} parent=1 // pred_fallthru
      _
    // Predicated region
    $region10: #{tpu_custom_call.1} parent=1 // pred_check
      _
    $region11: #{tpu_custom_call.1} parent=1 // pred_check_branch
      %33 = sbr.rel (0) target = $region13
    $region12: #{tpu_custom_call.1} parent=1 // pred_region
      _
    $region13: #{tpu_custom_call.1} parent=1 // pred_fallthru
      _
    // Predicated region
    $region14: #{tpu_custom_call.1} parent=1 // pred_check
      _
    $region15: #{tpu_custom_call.1} parent=1 // pred_check_branch
      %35 = sbr.rel (0) target = $region17
    $region16: #{tpu_custom_call.1} parent=1 // pred_region
      %s37 = ssub.s32 512, 512
      %38 = vsyncadd [#allocation6], %s37
      %s39 = sshll.u32 [#allocation5], 4
      %s40 = int_to_ptr.vmem [resolvable:$true] %s39
      %45 = dma.hbm_to_vmem [thread:$0]  %s3, 512, %s40, [#allocation6], 128, 128, 8
    $region17: #{tpu_custom_call.1} parent=1 // pred_fallthru
      _
    // Predicated region
    $region18: #{tpu_custom_call.1} parent=1 // pred_check
      _
    $region19: #{tpu_custom_call.1} parent=1 // pred_check_branch
      %47 = sbr.rel (0) target = $region21
    $region20: #{tpu_custom_call.1} parent=1 // pred_region
      %s49 = ssub.s32 512, 512
      %50 = vsyncadd [#allocation6], %s49
      %s51 = sshll.u32 [#allocation7], 4
      %s52 = int_to_ptr.vmem [resolvable:$true] %s51
      %57 = dma.hbm_to_vmem [thread:$0]  %s4, 512, %s52, [#allocation6], 128, 128, 8
    $region21: #{tpu_custom_call.1} parent=1 // pred_fallthru
      _
    // Predicated region
    $region22: #{tpu_custom_call.1} parent=1 // pred_check
      _
    $region23: #{tpu_custom_call.1} parent=1 // pred_check_branch
      %59 = sbr.rel (0) target = $region25
    $region24: #{tpu_custom_call.1} parent=1 // pred_region
      _
    $region25: #{tpu_custom_call.1} parent=1 // pred_fallthru
      _
    // Predicated region
    $region26: #{tpu_custom_call.1} parent=1 // pred_check
      _
    $region27: #{tpu_custom_call.1} parent=1 // pred_check_branch
      %61 = sbr.rel (0) target = $region29
    $region28: #{tpu_custom_call.1} parent=1 // pred_region
      _
    $region29: #{tpu_custom_call.1} parent=1 // pred_fallthru
      _
    // Predicated region
    $region30: #{tpu_custom_call.1} parent=1 // pred_check
      _
    $region31: #{tpu_custom_call.1} parent=1 // pred_check_branch
      %63 = sbr.rel (0) target = $region33
    $region32: #{tpu_custom_call.1} parent=1 // pred_region
      %64 = dma.done [#allocation3], 1024
    $region33: #{tpu_custom_call.1} parent=1 // pred_fallthru
      _
    // Predicated region
    $region34: #{tpu_custom_call.1} parent=1 // pred_check
      _
    $region35: #{tpu_custom_call.1} parent=1 // pred_check_branch
      %66 = sbr.rel (0) target = $region37
    $region36: #{tpu_custom_call.1} parent=1 // pred_region
      %67 = dma.done [#allocation6], 512
    $region37: #{tpu_custom_call.1} parent=1 // pred_fallthru
      _
    // Predicated region
    $region38: #{tpu_custom_call.1} parent=1 // pred_check
      _
    $region39: #{tpu_custom_call.1} parent=1 // pred_check_branch
      %69 = sbr.rel (0) target = $region41
    $region40: #{tpu_custom_call.1} parent=1 // pred_region
      %70 = dma.done [#allocation6], 512
    $region41: #{tpu_custom_call.1} parent=1 // pred_fallthru
      _
    %v71 = vld [vmem:[#allocation2] sm:$0xff]
    %v72 = vld [vmem:[#allocation2 + $0x8] sm:$0xff]
    %v73 = vld [vmem:[#allocation2 + $0x10] sm:$0xff]
    %v74 = vld [vmem:[#allocation2 + $0x18] sm:$0xff]
    %v75 = vld [vmem:[#allocation2 + $0x20] sm:$0xff]
    %v76 = vld [vmem:[#allocation2 + $0x28] sm:$0xff]
    %v77 = vld [vmem:[#allocation2 + $0x30] sm:$0xff]
    %v78 = vld [vmem:[#allocation2 + $0x38] sm:$0xff]
    %v79 = vld [vmem:[%s0] sm:$0xff]
    %v80 = vld [vmem:[#allocation5] sm:$0xff]
    %v81 = vld [vmem:[#allocation5 + $0x8] sm:$0xff]
    %v82 = vld [vmem:[#allocation5 + $0x10] sm:$0xff]
    %v83 = vld [vmem:[#allocation5 + $0x18] sm:$0xff]
    %vm84 = vcmask 261120
    %v86 = vsel %vm84, %v71, 0
    %v89 = vsel %vm84, %v72, 0
    %v92 = vsel %vm84, %v73, 0
    %v95 = vsel %vm84, %v74, 0
    %v98 = vsel %vm84, %v75, 0
    %v101 = vsel %vm84, %v76, 0
    %v104 = vsel %vm84, %v77, 0
    %v107 = vsel %vm84, %v78, 0
    %109 = vmatprep.subr.mxu0 0.0
    %110 = vmatpush1.msra.mxu0 0.0
    %111 = vmatprep.subr.mxu0 0.0
    %112 = vmatpush1.msra.mxu0 0.0
    %113 = vmatprep.subr.mxu0 0.0
    %114 = vmatpush1.msra.mxu0 0.0
    %115 = vmatprep.subr.mxu0 0.0
    %116 = vmatpush1.msra.mxu0 0.0
    %117 = vmatprep.subr.mxu0 0.0
    %118 = vmatpush1.msra.mxu0 0.0
    %119 = vmatprep.subr.mxu0 0.0
    %120 = vmatpush1.msra.mxu0 0.0
    %121 = vmatprep.subr.mxu0 0.0
    %122 = vmatpush1.msra.mxu0 0.0
    %123 = vmatprep.subr.mxu0 0.0
    %124 = vmatpush1.msra.mxu0 0.0
    %125 = vmatprep.subr.mxu0 0.0
    %126 = vmatpush1.msra.mxu0 0.0
    %127 = vmatprep.subr.mxu0 0.0
    %128 = vmatpush1.msra.mxu0 0.0
    %129 = vmatprep.subr.mxu0 0.0
    %130 = vmatpush1.msra.mxu0 0.0
    %131 = vmatprep.subr.mxu0 0.0
    %132 = vmatpush1.msra.mxu0 0.0
    %133 = vmatprep.subr.mxu0 0.0
    %134 = vmatpush1.msra.mxu0 %v83
    %135 = vmatprep.subr.mxu0 0.0
    %136 = vmatpush1.msra.mxu0 %v82
    %137 = vmatprep.subr.mxu0 0.0
    %138 = vmatpush1.msra.mxu0 %v81
    %139 = vmatprep.subr.mxu0 0.0
    %140 = vmatpush1.msra.mxu0 %v80
    %141 = vmatprep.subr.mxu0 0.0
    %142 = vmatpush2.msra.mxu0 0.0
    %143 = vmatprep.subr.mxu0 0.0
    %144 = vmatpush2.msra.mxu0 0.0
    %145 = vmatprep.subr.mxu0 0.0
    %146 = vmatpush2.msra.mxu0 0.0
    %147 = vmatprep.subr.mxu0 0.0
    %148 = vmatpush2.msra.mxu0 0.0
    %149 = vmatprep.subr.mxu0 0.0
    %150 = vmatpush2.msra.mxu0 0.0
    %151 = vmatprep.subr.mxu0 0.0
    %152 = vmatpush2.msra.mxu0 0.0
    %153 = vmatprep.subr.mxu0 0.0
    %154 = vmatpush2.msra.mxu0 0.0
    %155 = vmatprep.subr.mxu0 0.0
    %156 = vmatpush2.msra.mxu0 0.0
    %157 = vmatprep.subr.mxu0 0.0
    %158 = vmatpush2.msra.mxu0 0.0
    %159 = vmatprep.subr.mxu0 0.0
    %160 = vmatpush2.msra.mxu0 0.0
    %161 = vmatprep.subr.mxu0 0.0
    %162 = vmatpush2.msra.mxu0 0.0
    %163 = vmatprep.subr.mxu0 0.0
    %164 = vmatpush2.msra.mxu0 0.0
    %165 = vmatprep.subr.mxu0 0.0
    %166 = vmatpush2.msra.mxu0 0.0
    %167 = vmatprep.subr.mxu0 0.0
    %168 = vmatpush2.msra.mxu0 0.0
    %169 = vmatprep.subr.mxu0 0.0
    %170 = vmatpush2.msra.mxu0 0.0
    %171 = vmatprep.subr.mxu0 0.0
    %172 = vmatpush2.msra.mxu0 0.0
    %173 = vmatprep.mubr.f32.mxu0 0.0
    %174 = vmatmul.mubr.f32.gmra.mxu0 %v86
    %v175 = vpop.f32.mrf.mxu0
    %v176 = vadd.f32 0.0, %v175
    %v177 = vpop.f32.mrf.mxu0
    %178 = vmatprep.mubr.f32.mxu0 0.0
    %179 = vmatmul.mubr.f32.gmra.mxu0 %v89
    %v180 = vpop.f32.mrf.mxu0
    %v181 = vadd.f32 0.0, %v180
    %v182 = vpop.f32.mrf.mxu0
    %183 = vmatprep.mubr.f32.mxu0 0.0
    %184 = vmatmul.mubr.f32.gmra.mxu0 %v92
    %v185 = vpop.f32.mrf.mxu0
    %v186 = vadd.f32 0.0, %v185
    %v187 = vpop.f32.mrf.mxu0
    %188 = vmatprep.mubr.f32.mxu0 0.0
    %189 = vmatmul.mubr.f32.gmra.mxu0 %v95
    %v190 = vpop.f32.mrf.mxu0
    %v191 = vadd.f32 0.0, %v190
    %v192 = vpop.f32.mrf.mxu0
    %193 = vmatprep.mubr.f32.mxu0 0.0
    %194 = vmatmul.mubr.f32.gmra.mxu0 %v98
    %v195 = vpop.f32.mrf.mxu0
    %v196 = vadd.f32 0.0, %v195
    %v197 = vpop.f32.mrf.mxu0
    %198 = vmatprep.mubr.f32.mxu0 0.0
    %199 = vmatmul.mubr.f32.gmra.mxu0 %v101
    %v200 = vpop.f32.mrf.mxu0
    %v201 = vadd.f32 0.0, %v200
    %v202 = vpop.f32.mrf.mxu0
    %203 = vmatprep.mubr.f32.mxu0 0.0
    %204 = vmatmul.mubr.f32.gmra.mxu0 %v104
    %v205 = vpop.f32.mrf.mxu0
    %v206 = vadd.f32 0.0, %v205
    %v207 = vpop.f32.mrf.mxu0
    %208 = vmatprep.mubr.f32.mxu0 0.0
    %209 = vmatmul.mubr.f32.gmra.mxu0 %v107
    %v210 = vpop.f32.mrf.mxu0
    %v211 = vadd.f32 0.0, %v210
    %v212 = vpop.f32.mrf.mxu0
    %213 = vdwg.mxu0
    %v214 = vld [vmem:[#allocation7] sm:$0xff]
    %v215 = vld [vmem:[#allocation7 + $0x8] sm:$0xff]
    %v216 = vld [vmem:[#allocation7 + $0x10] sm:$0xff]
    %v217 = vld [vmem:[#allocation7 + $0x18] sm:$0xff]
    %v218 = vld [vmem:[%s5] sm:$0x1]
    %v220 = vlaneseq
    %v221 = vshrl.u32 %v220, 7
    %v222 = vsub.s32 0, %v221
    %v223 = vrot.slane %v218, %v222
    %v226 = vsel %vm84, %v79, 0
    %228 = vmatprep.subr.mxu0 0.0
    %229 = vmatpush1.msra.mxu0 0.0
    %230 = vmatprep.subr.mxu0 0.0
    %231 = vmatpush1.msra.mxu0 0.0
    %232 = vmatprep.subr.mxu0 0.0
    %233 = vmatpush1.msra.mxu0 0.0
    %234 = vmatprep.subr.mxu0 0.0
    %235 = vmatpush1.msra.mxu0 0.0
    %236 = vmatprep.subr.mxu0 0.0
    %237 = vmatpush1.msra.mxu0 0.0
    %238 = vmatprep.subr.mxu0 0.0
    %239 = vmatpush1.msra.mxu0 0.0
    %240 = vmatprep.subr.mxu0 0.0
    %241 = vmatpush1.msra.mxu0 0.0
    %242 = vmatprep.subr.mxu0 0.0
    %243 = vmatpush1.msra.mxu0 0.0
    %244 = vmatprep.subr.mxu0 0.0
    %245 = vmatpush1.msra.mxu0 0.0
    %246 = vmatprep.subr.mxu0 0.0
    %247 = vmatpush1.msra.mxu0 0.0
    %248 = vmatprep.subr.mxu0 0.0
    %249 = vmatpush1.msra.mxu0 0.0
    %250 = vmatprep.subr.mxu0 0.0
    %251 = vmatpush1.msra.mxu0 0.0
    %252 = vmatprep.subr.mxu0 0.0
    %253 = vmatpush1.msra.mxu0 %v217
    %254 = vmatprep.subr.mxu0 0.0
    %255 = vmatpush1.msra.mxu0 %v216
    %256 = vmatprep.subr.mxu0 0.0
    %257 = vmatpush1.msra.mxu0 %v215
    %258 = vmatprep.subr.mxu0 0.0
    %259 = vmatpush1.msra.mxu0 %v214
    %260 = vmatprep.subr.mxu0 0.0
    %261 = vmatpush2.msra.mxu0 0.0
    %262 = vmatprep.subr.mxu0 0.0
    %263 = vmatpush2.msra.mxu0 0.0
    %264 = vmatprep.subr.mxu0 0.0
    %265 = vmatpush2.msra.mxu0 0.0
    %266 = vmatprep.subr.mxu0 0.0
    %267 = vmatpush2.msra.mxu0 0.0
    %268 = vmatprep.subr.mxu0 0.0
    %269 = vmatpush2.msra.mxu0 0.0
    %270 = vmatprep.subr.mxu0 0.0
    %271 = vmatpush2.msra.mxu0 0.0
    %272 = vmatprep.subr.mxu0 0.0
    %273 = vmatpush2.msra.mxu0 0.0
    %274 = vmatprep.subr.mxu0 0.0
    %275 = vmatpush2.msra.mxu0 0.0
    %276 = vmatprep.subr.mxu0 0.0
    %277 = vmatpush2.msra.mxu0 0.0
    %278 = vmatprep.subr.mxu0 0.0
    %279 = vmatpush2.msra.mxu0 0.0
    %280 = vmatprep.subr.mxu0 0.0
    %281 = vmatpush2.msra.mxu0 0.0
    %282 = vmatprep.subr.mxu0 0.0
    %283 = vmatpush2.msra.mxu0 0.0
    %284 = vmatprep.subr.mxu0 0.0
    %285 = vmatpush2.msra.mxu0 0.0
    %286 = vmatprep.subr.mxu0 0.0
    %287 = vmatpush2.msra.mxu0 0.0
    %288 = vmatprep.subr.mxu0 0.0
    %289 = vmatpush2.msra.mxu0 0.0
    %290 = vmatprep.subr.mxu0 0.0
    %291 = vmatpush2.msra.mxu0 0.0
    %292 = vmatprep.mubr.f32.mxu0 0.0
    %293 = vmatmul.mubr.f32.gmra.mxu0 %v226
    %v294 = vpop.f32.mrf.mxu0
    %v295 = vadd.f32 %v223, %v294
    %v296 = vpop.f32.mrf.mxu0
    %297 = vdwg.mxu0
    %v299 = vcombine.high %v295, %v295
    %v301 = vunpack.c.l.s4 1966171168
    %v302 = vunpack.c.0.s8 %v301
    %v303 = vlaneseq
    %v304 = vshrl.u32 %v303, 7
    %v305 = vsub.s32 %v302, %v304
    %v306 = vrot.slane %v295, %v305
    %v308 = vunpack.c.l.s4 1966171168
    %v309 = vunpack.c.0.s8 %v308
    %v310 = vlaneseq
    %v311 = vshrl.u32 %v310, 7
    %v312 = vsub.s32 %v309, %v311
    %v313 = vrot.slane %v299, %v312
    %v314 = vcombine.high %v306, %v306
    %v315 = vcombine.high %v313, %v313
    %v317 = vunpack.c.l.s4 1966171168
    %v318 = vunpack.c.0.s8 %v317
    %v319 = vlaneseq
    %v320 = vshrl.u32 %v319, 7
    %v321 = vsub.s32 %v318, %v320
    %v322 = vrot.slane %v306, %v321
    %v324 = vunpack.c.l.s4 1966171168
    %v325 = vunpack.c.0.s8 %v324
    %v326 = vlaneseq
    %v327 = vshrl.u32 %v326, 7
    %v328 = vsub.s32 %v325, %v327
    %v329 = vrot.slane %v313, %v328
    %v331 = vunpack.c.l.s4 1966171168
    %v332 = vunpack.c.0.s8 %v331
    %v333 = vlaneseq
    %v334 = vshrl.u32 %v333, 7
    %v335 = vsub.s32 %v332, %v334
    %v336 = vrot.slane %v314, %v335
    %v338 = vunpack.c.l.s4 1966171168
    %v339 = vunpack.c.0.s8 %v338
    %v340 = vlaneseq
    %v341 = vshrl.u32 %v340, 7
    %v342 = vsub.s32 %v339, %v341
    %v343 = vrot.slane %v315, %v342
    %v344 = vcombine.high %v322, %v322
    %v345 = vcombine.high %v329, %v329
    %v346 = vcombine.high %v336, %v336
    %v347 = vcombine.high %v343, %v343
    %v348 = vlaneseq
    %v349 = vshrl.u32 %v348, 7
    %v350 = vsub.s32 0, %v349
    %v351 = vrot.slane %v322, %v350
    %v352 = vlaneseq
    %v353 = vshrl.u32 %v352, 7
    %v354 = vsub.s32 0, %v353
    %v355 = vrot.slane %v336, %v354
    %v356 = vlaneseq
    %v357 = vshrl.u32 %v356, 7
    %v358 = vsub.s32 0, %v357
    %v359 = vrot.slane %v344, %v358
    %v360 = vlaneseq
    %v361 = vshrl.u32 %v360, 7
    %v362 = vsub.s32 0, %v361
    %v363 = vrot.slane %v346, %v362
    %v364 = vlaneseq
    %v365 = vshrl.u32 %v364, 7
    %v366 = vsub.s32 0, %v365
    %v367 = vrot.slane %v329, %v366
    %v368 = vlaneseq
    %v369 = vshrl.u32 %v368, 7
    %v370 = vsub.s32 0, %v369
    %v371 = vrot.slane %v343, %v370
    %v372 = vlaneseq
    %v373 = vshrl.u32 %v372, 7
    %v374 = vsub.s32 0, %v373
    %v375 = vrot.slane %v345, %v374
    %v376 = vlaneseq
    %v377 = vshrl.u32 %v376, 7
    %v378 = vsub.s32 0, %v377
    %v379 = vrot.slane %v347, %v378
    %v388 = vadd.f32 %v176, %v351
    %v389 = vadd.f32 %v181, %v355
    %v390 = vadd.f32 %v186, %v359
    %v391 = vadd.f32 %v191, %v363
    %v392 = vadd.f32 %v196, %v367
    %v393 = vadd.f32 %v201, %v371
    %v394 = vadd.f32 %v206, %v375
    %v395 = vadd.f32 %v211, %v379
    %v396 = vtanh.pop %v388
    %v397 = vtanh.pop %v389
    %v398 = vtanh.pop %v390
    %v399 = vtanh.pop %v391
    %v400 = vtanh.pop %v392
    %v401 = vtanh.pop %v393
    %v402 = vtanh.pop %v394
    %v403 = vtanh.pop %v395
    %v404 = vld [vmem:[%s6] sm:$0x1]
    %v406 = vlaneseq
    %v407 = vshrl.u32 %v406, 7
    %v408 = vsub.s32 0, %v407
    %v409 = vrot.slane %v404, %v408
    %v411 = vmul.f32 %v396, %v409
    %v412 = vmul.f32 %v397, %v409
    %v413 = vmul.f32 %v398, %v409
    %v414 = vmul.f32 %v399, %v409
    %v415 = vmul.f32 %v400, %v409
    %v416 = vmul.f32 %v401, %v409
    %v417 = vmul.f32 %v402, %v409
    %v418 = vmul.f32 %v403, %v409
    %v419 = vsel %vm84, %v411, 0.0
    %420 = vadd.xlane.f32.xlu0 %v419
    %v421 = vpop.xlane.xlu0 %420
    %v422 = vsel %vm84, %v412, 0.0
    %423 = vadd.xlane.f32.xlu0 %v422
    %v424 = vpop.xlane.xlu0 %423
    %v425 = vsel %vm84, %v413, 0.0
    %426 = vadd.xlane.f32.xlu0 %v425
    %v427 = vpop.xlane.xlu0 %426
    %v428 = vsel %vm84, %v414, 0.0
    %429 = vadd.xlane.f32.xlu0 %v428
    %v430 = vpop.xlane.xlu0 %429
    %v431 = vsel %vm84, %v415, 0.0
    %432 = vadd.xlane.f32.xlu0 %v431
    %v433 = vpop.xlane.xlu0 %432
    %v434 = vsel %vm84, %v416, 0.0
    %435 = vadd.xlane.f32.xlu0 %v434
    %v436 = vpop.xlane.xlu0 %435
    %v437 = vsel %vm84, %v417, 0.0
    %438 = vadd.xlane.f32.xlu0 %v437
    %v439 = vpop.xlane.xlu0 %438
    %v440 = vsel %vm84, %v418, 0.0
    %441 = vadd.xlane.f32.xlu0 %v440
    %v442 = vpop.xlane.xlu0 %441
    %v443 = vld [vmem:[%s2] sm:$0xff]
    %v444 = vlaneseq
    %v445 = vand.u32 %v444, 127
    %446 = vset.pattern.permute.xlu0 0
    %447 = vperm.xlu0 %446, %v443
    %v448 = vpop.permute.xlu0 %447
    %vm449 = vcmp.lt.s32.totalorder %v445, %v448
    %v458 = vlaneseq
    %v459 = vshrl.u32 %v458, 7
    %v460 = vsub.s32 %v445, %v459
    %v461 = vrot.slane %v421, %v460
    %v462 = vlaneseq
    %v463 = vshrl.u32 %v462, 7
    %v464 = vsub.s32 %v445, %v463
    %v465 = vrot.slane %v424, %v464
    %v466 = vlaneseq
    %v467 = vshrl.u32 %v466, 7
    %v468 = vsub.s32 %v445, %v467
    %v469 = vrot.slane %v427, %v468
    %v470 = vlaneseq
    %v471 = vshrl.u32 %v470, 7
    %v472 = vsub.s32 %v445, %v471
    %v473 = vrot.slane %v430, %v472
    %v474 = vlaneseq
    %v475 = vshrl.u32 %v474, 7
    %v476 = vsub.s32 %v445, %v475
    %v477 = vrot.slane %v433, %v476
    %v478 = vlaneseq
    %v479 = vshrl.u32 %v478, 7
    %v480 = vsub.s32 %v445, %v479
    %v481 = vrot.slane %v436, %v480
    %v482 = vlaneseq
    %v483 = vshrl.u32 %v482, 7
    %v484 = vsub.s32 %v445, %v483
    %v485 = vrot.slane %v439, %v484
    %v486 = vlaneseq
    %v487 = vshrl.u32 %v486, 7
    %v488 = vsub.s32 %v445, %v487
    %v489 = vrot.slane %v442, %v488
    %vm490 = vcmask 1041409
    %v491 = vsel %vm490, %v465, %v461
    %vm492 = vcmask 1042434
    %v493 = vsel %vm492, %v469, %v491
    %vm494 = vcmask 1043459
    %v495 = vsel %vm494, %v473, %v493
    %vm496 = vcmask 1044484
    %v497 = vsel %vm496, %v477, %v495
    %vm498 = vcmask 1045509
    %v499 = vsel %vm498, %v481, %v497
    %vm500 = vcmask 1046534
    %v501 = vsel %vm500, %v485, %v499
    %vm502 = vcmask 1047559
    %v503 = vsel %vm502, %v489, %v501
    %v505 = vsel %vm449, %v503, -1e+30
    %vm506 = vcmask 64512
    %v507 = vsel %vm506, %v505, -inf
    %508 = vmax.xlane.f32.xlu0 %v507
    %v509 = vpop.xlane.xlu0 %508
    %v510 = vsub.f32 %v505, %v509
    %v511 = vmul.f32 %v510, 1.442695
    %v512 = vpow.pop %v511
    %v513 = vsel %vm506, %v512, 0.0
    %514 = vadd.xlane.f32.xlu0 %v513
    %v515 = vpop.xlane.xlu0 %514
    %v516 = vrcp.pop %v515
    %v517 = vmul.f32 %v512, %v516
    %v518 = vlaneseq
    %v519 = vshrl.u32 %v518, 7
    %v520 = vsub.s32 0, %v519
    %v521 = vrot.slane %v517, %v520
    %523 = vbcast.lane.b32.xlu0 %v521, 256
    %v524 = vpop.permute.xlu0 %523
    %v525 = vlaneseq
    %v526 = vshrl.u32 %v525, 7
    %v527 = vsub.s32 1, %v526
    %v528 = vrot.slane %v517, %v527
    %530 = vbcast.lane.b32.xlu0 %v528, 256
    %v531 = vpop.permute.xlu0 %530
    %v532 = vlaneseq
    %v533 = vshrl.u32 %v532, 7
    %v534 = vsub.s32 2, %v533
    %v535 = vrot.slane %v517, %v534
    %537 = vbcast.lane.b32.xlu0 %v535, 256
    %v538 = vpop.permute.xlu0 %537
    %v539 = vlaneseq
    %v540 = vshrl.u32 %v539, 7
    %v541 = vsub.s32 3, %v540
    %v542 = vrot.slane %v517, %v541
    %544 = vbcast.lane.b32.xlu0 %v542, 256
    %v545 = vpop.permute.xlu0 %544
    %v546 = vlaneseq
    %v547 = vshrl.u32 %v546, 7
    %v548 = vsub.s32 4, %v547
    %v549 = vrot.slane %v517, %v548
    %551 = vbcast.lane.b32.xlu0 %v549, 256
    %v552 = vpop.permute.xlu0 %551
    %v553 = vlaneseq
    %v554 = vshrl.u32 %v553, 7
    %v555 = vsub.s32 5, %v554
    %v556 = vrot.slane %v517, %v555
    %558 = vbcast.lane.b32.xlu0 %v556, 256
    %v559 = vpop.permute.xlu0 %558
    %v560 = vlaneseq
    %v561 = vshrl.u32 %v560, 7
    %v562 = vsub.s32 6, %v561
    %v563 = vrot.slane %v517, %v562
    %565 = vbcast.lane.b32.xlu0 %v563, 256
    %v566 = vpop.permute.xlu0 %565
    %v567 = vlaneseq
    %v568 = vshrl.u32 %v567, 7
    %v569 = vsub.s32 7, %v568
    %v570 = vrot.slane %v517, %v569
    %572 = vbcast.lane.b32.xlu0 %v570, 256
    %v573 = vpop.permute.xlu0 %572
    %v574 = vmul.f32 %v524, %v71
    %v575 = vmul.f32 %v531, %v72
    %v576 = vmul.f32 %v538, %v73
    %v577 = vmul.f32 %v545, %v74
    %v578 = vmul.f32 %v552, %v75
    %v579 = vmul.f32 %v559, %v76
    %v580 = vmul.f32 %v566, %v77
    %v581 = vmul.f32 %v573, %v78
    %v582 = vsel %vm84, %v574, 0.0
    %v583 = vrot.slane %v582, 4
    %v584 = vadd.f32 %v582, %v583
    %v585 = vrot.slane %v584, 2
    %v586 = vadd.f32 %v584, %v585
    %v587 = vrot.slane %v586, 1
    %v588 = vadd.f32 %v586, %v587
    %v589 = vsel %vm84, %v575, 0.0
    %v590 = vrot.slane %v589, 4
    %v591 = vadd.f32 %v589, %v590
    %v592 = vrot.slane %v591, 2
    %v593 = vadd.f32 %v591, %v592
    %v594 = vrot.slane %v593, 1
    %v595 = vadd.f32 %v593, %v594
    %v596 = vsel %vm84, %v576, 0.0
    %v597 = vrot.slane %v596, 4
    %v598 = vadd.f32 %v596, %v597
    %v599 = vrot.slane %v598, 2
    %v600 = vadd.f32 %v598, %v599
    %v601 = vrot.slane %v600, 1
    %v602 = vadd.f32 %v600, %v601
    %v603 = vsel %vm84, %v577, 0.0
    %v604 = vrot.slane %v603, 4
    %v605 = vadd.f32 %v603, %v604
    %v606 = vrot.slane %v605, 2
    %v607 = vadd.f32 %v605, %v606
    %v608 = vrot.slane %v607, 1
    %v609 = vadd.f32 %v607, %v608
    %v610 = vsel %vm84, %v578, 0.0
    %v611 = vrot.slane %v610, 4
    %v612 = vadd.f32 %v610, %v611
    %v613 = vrot.slane %v612, 2
    %v614 = vadd.f32 %v612, %v613
    %v615 = vrot.slane %v614, 1
    %v616 = vadd.f32 %v614, %v615
    %v617 = vsel %vm84, %v579, 0.0
    %v618 = vrot.slane %v617, 4
    %v619 = vadd.f32 %v617, %v618
    %v620 = vrot.slane %v619, 2
    %v621 = vadd.f32 %v619, %v620
    %v622 = vrot.slane %v621, 1
    %v623 = vadd.f32 %v621, %v622
    %v624 = vsel %vm84, %v580, 0.0
    %v625 = vrot.slane %v624, 4
    %v626 = vadd.f32 %v624, %v625
    %v627 = vrot.slane %v626, 2
    %v628 = vadd.f32 %v626, %v627
    %v629 = vrot.slane %v628, 1
    %v630 = vadd.f32 %v628, %v629
    %v631 = vsel %vm84, %v581, 0.0
    %v632 = vrot.slane %v631, 4
    %v633 = vadd.f32 %v631, %v632
    %v634 = vrot.slane %v633, 2
    %v635 = vadd.f32 %v633, %v634
    %v636 = vrot.slane %v635, 1
    %v637 = vadd.f32 %v635, %v636
    %v646 = vsel %vm490, %v595, %v588
    %v647 = vsel %vm492, %v602, %v646
    %v648 = vsel %vm494, %v609, %v647
    %v649 = vsel %vm496, %v616, %v648
    %v650 = vsel %vm498, %v623, %v649
    %v651 = vsel %vm500, %v630, %v650
    %v652 = vsel %vm502, %v637, %v651
    %654 = vst.msk [vmem:[#allocation8] sm:$0xff] %vm84, %v652
    %655 = vst.msk [vmem:[#allocation9] sm:$0xff] %vm506, %v517
    // Predicated region
    $region42: #{tpu_custom_call.1} parent=1 // pred_check
      _
    $region43: #{tpu_custom_call.1} parent=1 // pred_check_branch
      %657 = sbr.rel (0) target = $region45
    $region44: #{tpu_custom_call.1} parent=1 // pred_region
      %s659 = ssub.s32 128, 128
      %660 = vsyncadd [#allocation4], %s659
      %s662 = sshll.u32 [#allocation8], 4
      %s663 = int_to_ptr.vmem [resolvable:$true] %s662
      %665 = dma.vmem_to_hbm [thread:$0]  %s663, 128, %s7, [#allocation4]
    $region45: #{tpu_custom_call.1} parent=1 // pred_fallthru
      _
    // Predicated region
    $region46: #{tpu_custom_call.1} parent=1 // pred_check
      _
    $region47: #{tpu_custom_call.1} parent=1 // pred_check_branch
      %667 = sbr.rel (0) target = $region49
    $region48: #{tpu_custom_call.1} parent=1 // pred_region
      %s669 = ssub.s32 128, 128
      %670 = vsyncadd [#allocation10], %s669
      %s672 = sshll.u32 [#allocation9], 4
      %s673 = int_to_ptr.vmem [resolvable:$true] %s672
      %675 = dma.vmem_to_hbm [thread:$0]  %s673, 128, %s8, [#allocation10]
    $region49: #{tpu_custom_call.1} parent=1 // pred_fallthru
      _
    // Predicated region
    $region50: #{tpu_custom_call.1} parent=1 // pred_check
      _
    $region51: #{tpu_custom_call.1} parent=1 // pred_check_branch
      %677 = sbr.rel (0) target = $region53
    $region52: #{tpu_custom_call.1} parent=1 // pred_region
      %678 = dma.done [#allocation4], 128
    $region53: #{tpu_custom_call.1} parent=1 // pred_fallthru
      _
    // Predicated region
    $region54: #{tpu_custom_call.1} parent=1 // pred_check
      _
    $region55: #{tpu_custom_call.1} parent=1 // pred_check_branch
      %680 = sbr.rel (0) target = $region57
    $region56: #{tpu_custom_call.1} parent=1 // pred_region
      %681 = dma.done [#allocation10], 128
    $region57: #{tpu_custom_call.1} parent=1 // pred_fallthru
      _
    %682 = vsyncpa [#allocation3], 1
    %683 = vsyncpa [#allocation6], 1
    %684 = vsyncpa [#allocation4], 1
    %685 = vsyncpa [#allocation10], 1

</llo_original>
